<compile_context>
chip_gen: v7x
topology: tpu7x:2x2x1
jax: 0.10.0
libtpu: 0.0.40
codegen_flags: <defaults>
</compile_context>

<pallas_src>
import jax
import jax.numpy as jnp
from jax.experimental import pallas as pl
from jax.experimental.pallas import tpu as pltpu

LEAKY_SLOPE = 0.01  # nn.LeakyReLU default negative_slope


def _leaky_relu(x):
    # max(x, a*x) == LeakyReLU(x) for 0 < a < 1; cheaper than where(cmp, ...).
    return jnp.maximum(x, LEAKY_SLOPE * x)


def matchnet_kernel(x_ref,
                    w1_ref, b1_ref,
                    w2_ref, b2_ref,
                    w3_ref, b3_ref,
                    w4_ref, b4_ref,
                    o_ref):
    # Activations are [features, batch]; batch is on lanes (dense, unmasked).
    x = x_ref[...]                                                  # (6,  tb)

    h = jnp.dot(w1_ref[...], x, preferred_element_type=jnp.float32) + b1_ref[...]   # (32,  tb)
    h = _leaky_relu(h)

    h = jnp.dot(w2_ref[...], h, preferred_element_type=jnp.float32) + b2_ref[...]   # (128, tb)
    h = _leaky_relu(h)

    h = jnp.dot(w3_ref[...], h, preferred_element_type=jnp.float32) + b3_ref[...]   # (32,  tb)
    h = _leaky_relu(h)

    z = jnp.dot(w4_ref[...], h, preferred_element_type=jnp.float32) + b4_ref[...]   # (1,   tb)
    o_ref[...] = jax.nn.sigmoid(z)                                   # lane-dense store


def matchnet_forward(x, params, *, tb=512):
    """x: [B, 6] float32.  params: (w1,b1,...,w4,b4) with w_i (out,in), b_i (out,1).

    tb: batch tile (lane dim). Default 512; sweep 512-2048 on v5e/v6e, keep
    <= ~2048 on v7x (64 MiB VMEM) and make sure B >= 2*tb per chip so both
    TensorCores get grid steps.
    """
    B, F = x.shape
    assert F == 6

    n_tiles = pl.cdiv(B, tb)
    B_pad = n_tiles * tb

    # Transpose to [features, batch] and pad batch (lanes) to a tile multiple.
    x_t = x.T                                                        # (6, B)
    if B_pad != B:
        x_t = jnp.pad(x_t, ((0, 0), (0, B_pad - B)))

    # Parameters are tiny: give every grid step the full (resident) block.
    def full_spec(shape):
        return pl.BlockSpec(shape, lambda i: (0,) * len(shape))

    in_specs = [pl.BlockSpec((F, tb), lambda i: (0, i))]
    for p in params:
        in_specs.append(full_spec(p.shape))

    out = pl.pallas_call(
        matchnet_kernel,
        out_shape=jax.ShapeDtypeStruct((1, B_pad), jnp.float32),
        grid_spec=pltpu.PrefetchScalarGridSpec(
            num_scalar_prefetch=0,
            grid=(n_tiles,),
            in_specs=in_specs,
            out_specs=pl.BlockSpec((1, tb), lambda i: (0, i)),   # lane-dense output
        ),
        compiler_params=pltpu.CompilerParams(
            dimension_semantics=("parallel",)),
    )(x_t, *params)

    # (1, B_pad) -> (B, 1), dropping padding.
    return out[:, :B].T


def init_params(key):
    # PyTorch nn.Linear layout: weight (out, in); bias kept 2-D as (out, 1).
    dims = [(6, 32), (32, 128), (128, 32), (32, 1)]
    params = []
    for idx, (din, dout) in enumerate(dims):
        kw, kb = jax.random.split(jax.random.fold_in(key, idx))
        w = jax.random.normal(kw, (dout, din), jnp.float32) * 0.1
        b = jax.random.normal(kb, (dout, 1), jnp.float32) * 0.1
        params += [w, b]
    return tuple(params)


def reference_forward(x, params):
    w1, b1, w2, b2, w3, b3, w4, b4 = params
    h = jax.nn.leaky_relu(x @ w1.T + b1.T, LEAKY_SLOPE)
    h = jax.nn.leaky_relu(h @ w2.T + b2.T, LEAKY_SLOPE)
    h = jax.nn.leaky_relu(h @ w3.T + b3.T, LEAKY_SLOPE)
    return jax.nn.sigmoid(h @ w4.T + b4.T)


if __name__ == "__main__":
    key = jax.random.PRNGKey(0)
    kx, kp = jax.random.split(key)

    B = 8  # small demo batch; forward implies input shape [B, 6]
    x = jax.random.normal(kx, (B, 6), jnp.float32)
    params = init_params(kp)

    out = matchnet_forward(x, params)
    out = jax.block_until_ready(out)

    ref = reference_forward(x, params)
    assert out.shape == (B, 1)
    assert jnp.allclose(out, ref, atol=1e-5, rtol=1e-5)

    print("KERNEL_OK")
</pallas_src>

<mosaic_0001>
module attributes {stable_mosaic.version = 11 : i64} {
  func.func @matchnet_kernel(%arg0: i32, %arg1: memref<6x512xf32, #tpu.memory_space<vmem>>, %arg2: memref<32x6xf32, #tpu.memory_space<vmem>>, %arg3: memref<32x1xf32, #tpu.memory_space<vmem>>, %arg4: memref<128x32xf32, #tpu.memory_space<vmem>>, %arg5: memref<128x1xf32, #tpu.memory_space<vmem>>, %arg6: memref<32x128xf32, #tpu.memory_space<vmem>>, %arg7: memref<32x1xf32, #tpu.memory_space<vmem>>, %arg8: memref<1x32xf32, #tpu.memory_space<vmem>>, %arg9: memref<1x1xf32, #tpu.memory_space<vmem>>, %arg10: memref<1x512xf32, #tpu.memory_space<vmem>>) attributes {dimension_semantics = [#tpu.dimension_semantics<parallel>], iteration_bounds = array<i64: 1>, scalar_prefetch = 0 : i64, scratch_operands = 0 : i64, tpu.core_type = #tpu.core_type<tc>, window_params = [{transform_indices = @transform_0, window_bounds = array<i64: 6, 512>}, {pipeline_mode = #tpu.pipeline_mode<synchronous>, transform_indices = @transform_1, window_bounds = array<i64: 32, 6>}, {pipeline_mode = #tpu.pipeline_mode<synchronous>, transform_indices = @transform_2, window_bounds = array<i64: 32, 1>}, {pipeline_mode = #tpu.pipeline_mode<synchronous>, transform_indices = @transform_3, window_bounds = array<i64: 128, 32>}, {pipeline_mode = #tpu.pipeline_mode<synchronous>, transform_indices = @transform_4, window_bounds = array<i64: 128, 1>}, {pipeline_mode = #tpu.pipeline_mode<synchronous>, transform_indices = @transform_5, window_bounds = array<i64: 32, 128>}, {pipeline_mode = #tpu.pipeline_mode<synchronous>, transform_indices = @transform_6, window_bounds = array<i64: 32, 1>}, {pipeline_mode = #tpu.pipeline_mode<synchronous>, transform_indices = @transform_7, window_bounds = array<i64: 1, 32>}, {pipeline_mode = #tpu.pipeline_mode<synchronous>, transform_indices = @transform_8, window_bounds = array<i64: 1, 1>}, {transform_indices = @transform_9, window_bounds = array<i64: 1, 512>}]} {
    %c0 = arith.constant 0 : index
    %c0_0 = arith.constant 0 : index
    %0 = vector.load %arg1[%c0, %c0_0] : memref<6x512xf32, #tpu.memory_space<vmem>>, vector<6x512xf32>
    %c0_1 = arith.constant 0 : index
    %c0_2 = arith.constant 0 : index
    %1 = vector.load %arg2[%c0_1, %c0_2] : memref<32x6xf32, #tpu.memory_space<vmem>>, vector<32x6xf32>
    %cst = arith.constant dense<0.000000e+00> : vector<32x512xf32>
    %2 = tpu.matmul %1, %0, %cst {dimension_numbers = #tpu.dot_dimension_numbers<[1], [0], [0], [1], [0, 0, 1, 1], [], []>} : vector<32x6xf32>, vector<6x512xf32>, vector<32x512xf32> -> vector<32x512xf32>
    %c0_3 = arith.constant 0 : index
    %c0_4 = arith.constant 0 : index
    %3 = vector.load %arg3[%c0_3, %c0_4] : memref<32x1xf32, #tpu.memory_space<vmem>>, vector<32x1xf32>
    %4 = vector.broadcast %3 : vector<32x1xf32> to vector<32x512xf32>
    %5 = arith.addf %2, %4 : vector<32x512xf32>
    %cst_5 = arith.constant 0.00999999977 : f32
    %6 = vector.broadcast %cst_5 : f32 to vector<32x512xf32>
    %7 = arith.mulf %6, %5 : vector<32x512xf32>
    %8 = arith.maximumf %5, %7 : vector<32x512xf32>
    %c0_6 = arith.constant 0 : index
    %c0_7 = arith.constant 0 : index
    %9 = vector.load %arg4[%c0_6, %c0_7] : memref<128x32xf32, #tpu.memory_space<vmem>>, vector<128x32xf32>
    %cst_8 = arith.constant dense<0.000000e+00> : vector<128x512xf32>
    %10 = tpu.matmul %9, %8, %cst_8 {dimension_numbers = #tpu.dot_dimension_numbers<[1], [0], [0], [1], [0, 0, 1, 1], [], []>} : vector<128x32xf32>, vector<32x512xf32>, vector<128x512xf32> -> vector<128x512xf32>
    %c0_9 = arith.constant 0 : index
    %c0_10 = arith.constant 0 : index
    %11 = vector.load %arg5[%c0_9, %c0_10] : memref<128x1xf32, #tpu.memory_space<vmem>>, vector<128x1xf32>
    %12 = vector.broadcast %11 : vector<128x1xf32> to vector<128x512xf32>
    %13 = arith.addf %10, %12 : vector<128x512xf32>
    %cst_11 = arith.constant 0.00999999977 : f32
    %14 = vector.broadcast %cst_11 : f32 to vector<128x512xf32>
    %15 = arith.mulf %14, %13 : vector<128x512xf32>
    %16 = arith.maximumf %13, %15 : vector<128x512xf32>
    %c0_12 = arith.constant 0 : index
    %c0_13 = arith.constant 0 : index
    %17 = vector.load %arg6[%c0_12, %c0_13] : memref<32x128xf32, #tpu.memory_space<vmem>>, vector<32x128xf32>
    %cst_14 = arith.constant dense<0.000000e+00> : vector<32x512xf32>
    %18 = tpu.matmul %17, %16, %cst_14 {dimension_numbers = #tpu.dot_dimension_numbers<[1], [0], [0], [1], [0, 0, 1, 1], [], []>} : vector<32x128xf32>, vector<128x512xf32>, vector<32x512xf32> -> vector<32x512xf32>
    %c0_15 = arith.constant 0 : index
    %c0_16 = arith.constant 0 : index
    %19 = vector.load %arg7[%c0_15, %c0_16] : memref<32x1xf32, #tpu.memory_space<vmem>>, vector<32x1xf32>
    %20 = vector.broadcast %19 : vector<32x1xf32> to vector<32x512xf32>
    %21 = arith.addf %18, %20 : vector<32x512xf32>
    %cst_17 = arith.constant 0.00999999977 : f32
    %22 = vector.broadcast %cst_17 : f32 to vector<32x512xf32>
    %23 = arith.mulf %22, %21 : vector<32x512xf32>
    %24 = arith.maximumf %21, %23 : vector<32x512xf32>
    %c0_18 = arith.constant 0 : index
    %c0_19 = arith.constant 0 : index
    %25 = vector.load %arg8[%c0_18, %c0_19] : memref<1x32xf32, #tpu.memory_space<vmem>>, vector<1x32xf32>
    %cst_20 = arith.constant dense<0.000000e+00> : vector<1x512xf32>
    %26 = tpu.matmul %25, %24, %cst_20 {dimension_numbers = #tpu.dot_dimension_numbers<[1], [0], [0], [1], [0, 0, 1, 1], [], []>} : vector<1x32xf32>, vector<32x512xf32>, vector<1x512xf32> -> vector<1x512xf32>
    %c0_21 = arith.constant 0 : index
    %c0_22 = arith.constant 0 : index
    %27 = vector.load %arg9[%c0_21, %c0_22] : memref<1x1xf32, #tpu.memory_space<vmem>>, vector<1x1xf32>
    %28 = vector.broadcast %27 : vector<1x1xf32> to vector<1x512xf32>
    %29 = arith.addf %26, %28 : vector<1x512xf32>
    %30 = arith.negf %29 : vector<1x512xf32>
    %31 = math.exp %30 : vector<1x512xf32>
    %cst_23 = arith.constant 1.000000e+00 : f32
    %32 = vector.broadcast %cst_23 : f32 to vector<1x512xf32>
    %33 = arith.addf %32, %31 : vector<1x512xf32>
    %34 = arith.divf %32, %33 : vector<1x512xf32>
    %c0_24 = arith.constant 0 : index
    %c0_25 = arith.constant 0 : index
    %35 = vector.load %arg10[%c0_24, %c0_25] : memref<1x512xf32, #tpu.memory_space<vmem>>, vector<1x512xf32>
    tpu.vector_store %arg10[%c0_24, %c0_25], %34 {strides = array<i32>} : memref<1x512xf32, #tpu.memory_space<vmem>>, vector<1x512xf32>,
    return
  }
  func.func @transform_0(%arg0: i32) -> (i32, i32) {
    %c0_i32 = arith.constant 0 : i32
    %c0_i32_0 = arith.constant 0 : i32
    return %c0_i32, %arg0 : i32, i32
  }
  func.func @transform_1(%arg0: i32) -> (i32, i32) {
    %c0_i32 = arith.constant 0 : i32
    %c0_i32_0 = arith.constant 0 : i32
    %c0_i32_1 = arith.constant 0 : i32
    return %c0_i32, %c0_i32_0 : i32, i32
  }
  func.func @transform_2(%arg0: i32) -> (i32, i32) {
    %c0_i32 = arith.constant 0 : i32
    %c0_i32_0 = arith.constant 0 : i32
    %c0_i32_1 = arith.constant 0 : i32
    return %c0_i32, %c0_i32_0 : i32, i32
  }
  func.func @transform_3(%arg0: i32) -> (i32, i32) {
    %c0_i32 = arith.constant 0 : i32
    %c0_i32_0 = arith.constant 0 : i32
    %c0_i32_1 = arith.constant 0 : i32
    return %c0_i32, %c0_i32_0 : i32, i32
  }
  func.func @transform_4(%arg0: i32) -> (i32, i32) {
    %c0_i32 = arith.constant 0 : i32
    %c0_i32_0 = arith.constant 0 : i32
    %c0_i32_1 = arith.constant 0 : i32
    return %c0_i32, %c0_i32_0 : i32, i32
  }
  func.func @transform_5(%arg0: i32) -> (i32, i32) {
    %c0_i32 = arith.constant 0 : i32
    %c0_i32_0 = arith.constant 0 : i32
    %c0_i32_1 = arith.constant 0 : i32
    return %c0_i32, %c0_i32_0 : i32, i32
  }
  func.func @transform_6(%arg0: i32) -> (i32, i32) {
    %c0_i32 = arith.constant 0 : i32
    %c0_i32_0 = arith.constant 0 : i32
    %c0_i32_1 = arith.constant 0 : i32
    return %c0_i32, %c0_i32_0 : i32, i32
  }
  func.func @transform_7(%arg0: i32) -> (i32, i32) {
    %c0_i32 = arith.constant 0 : i32
    %c0_i32_0 = arith.constant 0 : i32
    %c0_i32_1 = arith.constant 0 : i32
    return %c0_i32, %c0_i32_0 : i32, i32
  }
  func.func @transform_8(%arg0: i32) -> (i32, i32) {
    %c0_i32 = arith.constant 0 : i32
    %c0_i32_0 = arith.constant 0 : i32
    %c0_i32_1 = arith.constant 0 : i32
    return %c0_i32, %c0_i32_0 : i32, i32
  }
  func.func @transform_9(%arg0: i32) -> (i32, i32) {
    %c0_i32 = arith.constant 0 : i32
    %c0_i32_0 = arith.constant 0 : i32
    return %c0_i32, %arg0 : i32, i32
  }
}

</mosaic_0001>

<llo_original>
// kernel: tpu_custom_call.1
$region0: #{tpu_custom_call.1}
  #allocation0 [shape = 'u32[]', space=smem, size = 0x4, offset = 0x4, fixed_abs, tag = 'smem constant byte address 0x4 - core index']
  #allocation1 [shape = 'u32[144,128]{1,0:T(1,128)}', space=vmem, size = 0x12000, scoped, tag = 'internal scratch']
  #allocation2 [shape = 'f32[1,1]{1,0:T(1,128)S(1)}', space=vmem, size = 0x200, scoped, tag = 'scoped memory for tpu_custom_call.1']
  %s0 = inlined_call_operand.vmem [shape: f32[6,512], index: 0, kind: input, shape index: {}]
  %s1 = inlined_call_operand.vmem [shape: f32[32,6], index: 1, kind: input, shape index: {}]
  %s2 = inlined_call_operand.vmem [shape: f32[32,1], index: 2, kind: input, shape index: {}]
  %s3 = inlined_call_operand.vmem [shape: f32[128,32], index: 3, kind: input, shape index: {}]
  %s4 = inlined_call_operand.vmem [shape: f32[128,1], index: 4, kind: input, shape index: {}]
  %s5 = inlined_call_operand.vmem [shape: f32[32,128], index: 5, kind: input, shape index: {}]
  %s6 = inlined_call_operand.vmem [shape: f32[32,1], index: 6, kind: input, shape index: {}]
  %s7 = inlined_call_operand.vmem [shape: f32[1,32], index: 7, kind: input, shape index: {}]
  %s8 = inlined_call_operand.<no memory space> [shape: f32[1,1], index: 8, kind: input, shape index: {}]
  %s9 = inlined_call_operand.hbm [shape: f32[1,512], index: 9, kind: output, shape index: {}]
  %s10 = sld [smem:[#allocation0]]
  $region46: #{tpu_custom_call.1} parent=0
    _
  %s12 = ssub.s32 1, %s10
  %s13 = scalar_select 0, %s12, %s10
  %v14 = vstv %s8
  %15 = vst [vmem:[#allocation2] sm:$0x1] %v14
  $region1: #{tpu_custom_call.1} parent=0
    #allocation3 [shape = 'u8[2048]{0}', space=vmem, size = 0x800, scoped, tag = 'output window, operand 0, single buffered']
    #allocation4 [shape = 's32[1]{0}', space=sflag, size = 0x4, scoped, tag = 'scoped memory for tpu_custom_call.1']
    %16 = vsyncpa [#allocation4], 0
    // Predicated region
    $region2: #{tpu_custom_call.1} parent=1 // pred_check
      _
    $region3: #{tpu_custom_call.1} parent=1 // pred_check_branch
      %18 = sbr.rel (0) target = $region5
    $region4: #{tpu_custom_call.1} parent=1 // pred_region
      _
    $region5: #{tpu_custom_call.1} parent=1 // pred_fallthru
      _
    // Predicated region
    $region6: #{tpu_custom_call.1} parent=1 // pred_check
      _
    $region7: #{tpu_custom_call.1} parent=1 // pred_check_branch
      %20 = sbr.rel (0) target = $region9
    $region8: #{tpu_custom_call.1} parent=1 // pred_region
      _
    $region9: #{tpu_custom_call.1} parent=1 // pred_fallthru
      _
    // Predicated region
    $region10: #{tpu_custom_call.1} parent=1 // pred_check
      _
    $region11: #{tpu_custom_call.1} parent=1 // pred_check_branch
      %22 = sbr.rel (0) target = $region13
    $region12: #{tpu_custom_call.1} parent=1 // pred_region
      _
    $region13: #{tpu_custom_call.1} parent=1 // pred_fallthru
      _
    // Predicated region
    $region14: #{tpu_custom_call.1} parent=1 // pred_check
      _
    $region15: #{tpu_custom_call.1} parent=1 // pred_check_branch
      %24 = sbr.rel (0) target = $region17
    $region16: #{tpu_custom_call.1} parent=1 // pred_region
      _
    $region17: #{tpu_custom_call.1} parent=1 // pred_fallthru
      _
    // Predicated region
    $region18: #{tpu_custom_call.1} parent=1 // pred_check
      _
    $region19: #{tpu_custom_call.1} parent=1 // pred_check_branch
      %26 = sbr.rel (0) target = $region21
    $region20: #{tpu_custom_call.1} parent=1 // pred_region
      _
    $region21: #{tpu_custom_call.1} parent=1 // pred_fallthru
      _
    // Predicated region
    $region22: #{tpu_custom_call.1} parent=1 // pred_check
      _
    $region23: #{tpu_custom_call.1} parent=1 // pred_check_branch
      %28 = sbr.rel (0) target = $region25
    $region24: #{tpu_custom_call.1} parent=1 // pred_region
      _
    $region25: #{tpu_custom_call.1} parent=1 // pred_fallthru
      _
    // Predicated region
    $region26: #{tpu_custom_call.1} parent=1 // pred_check
      _
    $region27: #{tpu_custom_call.1} parent=1 // pred_check_branch
      %30 = sbr.rel (0) target = $region29
    $region28: #{tpu_custom_call.1} parent=1 // pred_region
      _
    $region29: #{tpu_custom_call.1} parent=1 // pred_fallthru
      _
    // Predicated region
    $region30: #{tpu_custom_call.1} parent=1 // pred_check
      _
    $region31: #{tpu_custom_call.1} parent=1 // pred_check_branch
      %32 = sbr.rel (0) target = $region33
    $region32: #{tpu_custom_call.1} parent=1 // pred_region
      _
    $region33: #{tpu_custom_call.1} parent=1 // pred_fallthru
      _
    // Predicated region
    $region34: #{tpu_custom_call.1} parent=1 // pred_check
      _
    $region35: #{tpu_custom_call.1} parent=1 // pred_check_branch
      %34 = sbr.rel (0) target = $region37
    $region36: #{tpu_custom_call.1} parent=1 // pred_region
      _
    $region37: #{tpu_custom_call.1} parent=1 // pred_fallthru
      _
    %v35 = vld [vmem:[%s0] sm:$0x3f]
    %v36 = vld [vmem:[%s0 + $0x8] sm:$0x3f]
    %v37 = vld [vmem:[%s0 + $0x10] sm:$0x3f]
    %v38 = vld [vmem:[%s0 + $0x18] sm:$0x3f]
    %v39 = vld [vmem:[%s1] sm:$0xff]
    %v40 = vld [vmem:[%s1 + $0x8] sm:$0xff]
    %v41 = vld [vmem:[%s1 + $0x10] sm:$0xff]
    %v42 = vld [vmem:[%s1 + $0x18] sm:$0xff]
    %v43 = vld [vmem:[%s2] sm:$0xff]
    %v44 = vld [vmem:[%s2 + $0x8] sm:$0xff]
    %v45 = vld [vmem:[%s2 + $0x10] sm:$0xff]
    %v46 = vld [vmem:[%s2 + $0x18] sm:$0xff]
    %48 = vset.pattern.permute.xlu0 0
    %49 = vperm.xlu0 %48, %v43
    %v50 = vpop.permute.xlu0 %49
    %53 = vset.pattern.permute.xlu0 0
    %54 = vperm.xlu0 %53, %v44
    %v55 = vpop.permute.xlu0 %54
    %58 = vset.pattern.permute.xlu0 0
    %59 = vperm.xlu0 %58, %v45
    %v60 = vpop.permute.xlu0 %59
    %63 = vset.pattern.permute.xlu0 0
    %64 = vperm.xlu0 %63, %v46
    %v65 = vpop.permute.xlu0 %64
    %vm67 = vcmask 48128
    %v69 = vsel %vm67, %v39, 0
    %v72 = vsel %vm67, %v40, 0
    %v75 = vsel %vm67, %v41, 0
    %v78 = vsel %vm67, %v42, 0
    %vm80 = vcmask 1045504
    %v82 = vsel %vm80, %v35, 0
    %v85 = vsel %vm80, %v36, 0
    %v88 = vsel %vm80, %v37, 0
    %v91 = vsel %vm80, %v38, 0
    %93 = vmatprep.subr.mxu0 %v85
    %94 = vmatpush1.msra.mxu0 %v82
    %95 = vmatprep.subr.mxu0 0.0
    %96 = vmatpush1.msra.mxu0 0.0
    %97 = vmatprep.subr.mxu0 0.0
    %98 = vmatpush1.msra.mxu0 0.0
    %99 = vmatprep.subr.mxu0 0.0
    %100 = vmatpush1.msra.mxu0 0.0
    %101 = vmatprep.subr.mxu0 0.0
    %102 = vmatpush1.msra.mxu0 0.0
    %103 = vmatprep.subr.mxu0 0.0
    %104 = vmatpush1.msra.mxu0 0.0
    %105 = vmatprep.subr.mxu0 0.0
    %106 = vmatpush1.msra.mxu0 0.0
    %107 = vmatprep.subr.mxu0 0.0
    %108 = vmatpush1.msra.mxu0 0.0
    %109 = vmatprep.subr.mxu0 0.0
    %110 = vmatpush1.msra.mxu0 0.0
    %111 = vmatprep.subr.mxu0 0.0
    %112 = vmatpush1.msra.mxu0 0.0
    %113 = vmatprep.subr.mxu0 0.0
    %114 = vmatpush1.msra.mxu0 0.0
    %115 = vmatprep.subr.mxu0 0.0
    %116 = vmatpush1.msra.mxu0 0.0
    %117 = vmatprep.subr.mxu0 0.0
    %118 = vmatpush1.msra.mxu0 0.0
    %119 = vmatprep.subr.mxu0 0.0
    %120 = vmatpush1.msra.mxu0 0.0
    %121 = vmatprep.subr.mxu0 0.0
    %122 = vmatpush1.msra.mxu0 0.0
    %123 = vmatprep.subr.mxu0 0.0
    %124 = vmatpush1.msra.mxu0 0.0
    %125 = vmatprep.subr.mxu0 0.0
    %126 = vmatpush1.msra.mxu0 0.0
    %127 = vmatprep.subr.mxu0 0.0
    %128 = vmatpush1.msra.mxu0 0.0
    %129 = vmatprep.subr.mxu0 0.0
    %130 = vmatpush1.msra.mxu0 0.0
    %131 = vmatprep.subr.mxu0 0.0
    %132 = vmatpush1.msra.mxu0 0.0
    %133 = vmatprep.subr.mxu0 0.0
    %134 = vmatpush1.msra.mxu0 0.0
    %135 = vmatprep.subr.mxu0 0.0
    %136 = vmatpush1.msra.mxu0 0.0
    %137 = vmatprep.subr.mxu0 0.0
    %138 = vmatpush1.msra.mxu0 0.0
    %139 = vmatprep.subr.mxu0 0.0
    %140 = vmatpush1.msra.mxu0 0.0
    %141 = vmatprep.subr.mxu0 0.0
    %142 = vmatpush1.msra.mxu0 0.0
    %143 = vmatprep.subr.mxu0 0.0
    %144 = vmatpush1.msra.mxu0 0.0
    %145 = vmatprep.subr.mxu0 0.0
    %146 = vmatpush1.msra.mxu0 0.0
    %147 = vmatprep.subr.mxu0 0.0
    %148 = vmatpush1.msra.mxu0 0.0
    %149 = vmatprep.subr.mxu0 0.0
    %150 = vmatpush1.msra.mxu0 0.0
    %151 = vmatprep.subr.mxu0 0.0
    %152 = vmatpush1.msra.mxu0 0.0
    %153 = vmatprep.subr.mxu0 0.0
    %154 = vmatpush1.msra.mxu0 0.0
    %155 = vmatprep.subr.mxu0 0.0
    %156 = vmatpush1.msra.mxu0 0.0
    %157 = vmatprep.mubr.f32.mxu0 0.0
    %158 = vmatmul.mubr.f32.gmra.mrb[0].mxu0 %v69
    %v159 = vpop.f32.mrb[0].mxu0
    %v160 = vadd.f32 %v50, %v159
    %v161 = vpop.f32.mrb[0].mxu0
    %v162 = vadd.f32 %v50, %v161
    %163 = vmatprep.mubr.f32.mxu0 0.0
    %164 = vmatmul.mubr.f32.gmra.mrb[0].mxu0 %v72
    %v165 = vpop.f32.mrb[0].mxu0
    %v166 = vadd.f32 %v55, %v165
    %v167 = vpop.f32.mrb[0].mxu0
    %v168 = vadd.f32 %v55, %v167
    %169 = vmatprep.mubr.f32.mxu0 0.0
    %170 = vmatmul.mubr.f32.gmra.mrb[0].mxu0 %v75
    %v171 = vpop.f32.mrb[0].mxu0
    %v172 = vadd.f32 %v60, %v171
    %v173 = vpop.f32.mrb[0].mxu0
    %v174 = vadd.f32 %v60, %v173
    %175 = vmatprep.mubr.f32.mxu0 0.0
    %176 = vmatmul.mubr.f32.gmra.mrb[0].mxu0 %v78
    %v177 = vpop.f32.mrb[0].mxu0
    %v178 = vadd.f32 %v65, %v177
    %v179 = vpop.f32.mrb[0].mxu0
    %v180 = vadd.f32 %v65, %v179
    %181 = vdwg.mxu0
    %182 = vmatprep.subr.mxu0 %v91
    %183 = vmatpush1.msra.mxu0 %v88
    %184 = vmatprep.subr.mxu0 0.0
    %185 = vmatpush1.msra.mxu0 0.0
    %186 = vmatprep.subr.mxu0 0.0
    %187 = vmatpush1.msra.mxu0 0.0
    %188 = vmatprep.subr.mxu0 0.0
    %189 = vmatpush1.msra.mxu0 0.0
    %190 = vmatprep.subr.mxu0 0.0
    %191 = vmatpush1.msra.mxu0 0.0
    %192 = vmatprep.subr.mxu0 0.0
    %193 = vmatpush1.msra.mxu0 0.0
    %194 = vmatprep.subr.mxu0 0.0
    %195 = vmatpush1.msra.mxu0 0.0
    %196 = vmatprep.subr.mxu0 0.0
    %197 = vmatpush1.msra.mxu0 0.0
    %198 = vmatprep.subr.mxu0 0.0
    %199 = vmatpush1.msra.mxu0 0.0
    %200 = vmatprep.subr.mxu0 0.0
    %201 = vmatpush1.msra.mxu0 0.0
    %202 = vmatprep.subr.mxu0 0.0
    %203 = vmatpush1.msra.mxu0 0.0
    %204 = vmatprep.subr.mxu0 0.0
    %205 = vmatpush1.msra.mxu0 0.0
    %206 = vmatprep.subr.mxu0 0.0
    %207 = vmatpush1.msra.mxu0 0.0
    %208 = vmatprep.subr.mxu0 0.0
    %209 = vmatpush1.msra.mxu0 0.0
    %210 = vmatprep.subr.mxu0 0.0
    %211 = vmatpush1.msra.mxu0 0.0
    %212 = vmatprep.subr.mxu0 0.0
    %213 = vmatpush1.msra.mxu0 0.0
    %214 = vmatprep.subr.mxu0 0.0
    %215 = vmatpush1.msra.mxu0 0.0
    %216 = vmatprep.subr.mxu0 0.0
    %217 = vmatpush1.msra.mxu0 0.0
    %218 = vmatprep.subr.mxu0 0.0
    %219 = vmatpush1.msra.mxu0 0.0
    %220 = vmatprep.subr.mxu0 0.0
    %221 = vmatpush1.msra.mxu0 0.0
    %222 = vmatprep.subr.mxu0 0.0
    %223 = vmatpush1.msra.mxu0 0.0
    %224 = vmatprep.subr.mxu0 0.0
    %225 = vmatpush1.msra.mxu0 0.0
    %226 = vmatprep.subr.mxu0 0.0
    %227 = vmatpush1.msra.mxu0 0.0
    %228 = vmatprep.subr.mxu0 0.0
    %229 = vmatpush1.msra.mxu0 0.0
    %230 = vmatprep.subr.mxu0 0.0
    %231 = vmatpush1.msra.mxu0 0.0
    %232 = vmatprep.subr.mxu0 0.0
    %233 = vmatpush1.msra.mxu0 0.0
    %234 = vmatprep.subr.mxu0 0.0
    %235 = vmatpush1.msra.mxu0 0.0
    %236 = vmatprep.subr.mxu0 0.0
    %237 = vmatpush1.msra.mxu0 0.0
    %238 = vmatprep.subr.mxu0 0.0
    %239 = vmatpush1.msra.mxu0 0.0
    %240 = vmatprep.subr.mxu0 0.0
    %241 = vmatpush1.msra.mxu0 0.0
    %242 = vmatprep.subr.mxu0 0.0
    %243 = vmatpush1.msra.mxu0 0.0
    %244 = vmatprep.subr.mxu0 0.0
    %245 = vmatpush1.msra.mxu0 0.0
    %246 = vmatprep.mubr.f32.mxu0 0.0
    %247 = vmatmul.mubr.f32.gmra.mrb[0].mxu0 %v69
    %v248 = vpop.f32.mrb[0].mxu0
    %v249 = vadd.f32 %v50, %v248
    %v250 = vpop.f32.mrb[0].mxu0
    %v251 = vadd.f32 %v50, %v250
    %252 = vmatprep.mubr.f32.mxu0 0.0
    %253 = vmatmul.mubr.f32.gmra.mrb[0].mxu0 %v72
    %v254 = vpop.f32.mrb[0].mxu0
    %v255 = vadd.f32 %v55, %v254
    %v256 = vpop.f32.mrb[0].mxu0
    %v257 = vadd.f32 %v55, %v256
    %258 = vmatprep.mubr.f32.mxu0 0.0
    %259 = vmatmul.mubr.f32.gmra.mrb[0].mxu0 %v75
    %v260 = vpop.f32.mrb[0].mxu0
    %v261 = vadd.f32 %v60, %v260
    %v262 = vpop.f32.mrb[0].mxu0
    %v263 = vadd.f32 %v60, %v262
    %264 = vmatprep.mubr.f32.mxu0 0.0
    %265 = vmatmul.mubr.f32.gmra.mrb[0].mxu0 %v78
    %v266 = vpop.f32.mrb[0].mxu0
    %v267 = vadd.f32 %v65, %v266
    %v268 = vpop.f32.mrb[0].mxu0
    %v269 = vadd.f32 %v65, %v268
    %270 = vdwg.mxu0
    %v271 = vmul.f32 %v160, 0.01
    %v272 = vmul.f32 %v162, 0.01
    %v273 = vmul.f32 %v249, 0.01
    %v274 = vmul.f32 %v251, 0.01
    %v275 = vmul.f32 %v166, 0.01
    %v276 = vmul.f32 %v168, 0.01
    %v277 = vmul.f32 %v255, 0.01
    %v278 = vmul.f32 %v257, 0.01
    %v279 = vmul.f32 %v172, 0.01
    %v280 = vmul.f32 %v174, 0.01
    %v281 = vmul.f32 %v261, 0.01
    %v282 = vmul.f32 %v263, 0.01
    %v283 = vmul.f32 %v178, 0.01
    %v284 = vmul.f32 %v180, 0.01
    %v285 = vmul.f32 %v267, 0.01
    %v286 = vmul.f32 %v269, 0.01
    %v287 = vmax.f32 %v160, %v271
    %v288 = vmax.f32 %v162, %v272
    %v289 = vmax.f32 %v249, %v273
    %v290 = vmax.f32 %v251, %v274
    %v291 = vmax.f32 %v166, %v275
    %v292 = vmax.f32 %v168, %v276
    %v293 = vmax.f32 %v255, %v277
    %v294 = vmax.f32 %v257, %v278
    %v295 = vmax.f32 %v172, %v279
    %v296 = vmax.f32 %v174, %v280
    %v297 = vmax.f32 %v261, %v281
    %v298 = vmax.f32 %v263, %v282
    %v299 = vmax.f32 %v178, %v283
    %v300 = vmax.f32 %v180, %v284
    %v301 = vmax.f32 %v267, %v285
    %v302 = vmax.f32 %v269, %v286
    %v303 = vld [vmem:[%s3] sm:$0xff]
    %v304 = vld [vmem:[%s3 + $0x8] sm:$0xff]
    %v305 = vld [vmem:[%s3 + $0x10] sm:$0xff]
    %v306 = vld [vmem:[%s3 + $0x18] sm:$0xff]
    %v307 = vld [vmem:[%s3 + $0x20] sm:$0xff]
    %v308 = vld [vmem:[%s3 + $0x28] sm:$0xff]
    %v309 = vld [vmem:[%s3 + $0x30] sm:$0xff]
    %v310 = vld [vmem:[%s3 + $0x38] sm:$0xff]
    %v311 = vld [vmem:[%s3 + $0x40] sm:$0xff]
    %v312 = vld [vmem:[%s3 + $0x48] sm:$0xff]
    %v313 = vld [vmem:[%s3 + $0x50] sm:$0xff]
    %v314 = vld [vmem:[%s3 + $0x58] sm:$0xff]
    %v315 = vld [vmem:[%s3 + $0x60] sm:$0xff]
    %v316 = vld [vmem:[%s3 + $0x68] sm:$0xff]
    %v317 = vld [vmem:[%s3 + $0x70] sm:$0xff]
    %v318 = vld [vmem:[%s3 + $0x78] sm:$0xff]
    %v319 = vld [vmem:[%s4] sm:$0xff]
    %v320 = vld [vmem:[%s4 + $0x8] sm:$0xff]
    %v321 = vld [vmem:[%s4 + $0x10] sm:$0xff]
    %v322 = vld [vmem:[%s4 + $0x18] sm:$0xff]
    %v323 = vld [vmem:[%s4 + $0x20] sm:$0xff]
    %v324 = vld [vmem:[%s4 + $0x28] sm:$0xff]
    %v325 = vld [vmem:[%s4 + $0x30] sm:$0xff]
    %v326 = vld [vmem:[%s4 + $0x38] sm:$0xff]
    %v327 = vld [vmem:[%s4 + $0x40] sm:$0xff]
    %v328 = vld [vmem:[%s4 + $0x48] sm:$0xff]
    %v329 = vld [vmem:[%s4 + $0x50] sm:$0xff]
    %v330 = vld [vmem:[%s4 + $0x58] sm:$0xff]
    %v331 = vld [vmem:[%s4 + $0x60] sm:$0xff]
    %v332 = vld [vmem:[%s4 + $0x68] sm:$0xff]
    %v333 = vld [vmem:[%s4 + $0x70] sm:$0xff]
    %v334 = vld [vmem:[%s4 + $0x78] sm:$0xff]
    %336 = vset.pattern.permute.xlu0 0
    %337 = vperm.xlu0 %336, %v319
    %v338 = vpop.permute.xlu0 %337
    %341 = vset.pattern.permute.xlu0 0
    %342 = vperm.xlu0 %341, %v320
    %v343 = vpop.permute.xlu0 %342
    %346 = vset.pattern.permute.xlu0 0
    %347 = vperm.xlu0 %346, %v321
    %v348 = vpop.permute.xlu0 %347
    %351 = vset.pattern.permute.xlu0 0
    %352 = vperm.xlu0 %351, %v322
    %v353 = vpop.permute.xlu0 %352
    %356 = vset.pattern.permute.xlu0 0
    %357 = vperm.xlu0 %356, %v323
    %v358 = vpop.permute.xlu0 %357
    %361 = vset.pattern.permute.xlu0 0
    %362 = vperm.xlu0 %361, %v324
    %v363 = vpop.permute.xlu0 %362
    %366 = vset.pattern.permute.xlu0 0
    %367 = vperm.xlu0 %366, %v325
    %v368 = vpop.permute.xlu0 %367
    %371 = vset.pattern.permute.xlu0 0
    %372 = vperm.xlu0 %371, %v326
    %v373 = vpop.permute.xlu0 %372
    %376 = vset.pattern.permute.xlu0 0
    %377 = vperm.xlu0 %376, %v327
    %v378 = vpop.permute.xlu0 %377
    %381 = vset.pattern.permute.xlu0 0
    %382 = vperm.xlu0 %381, %v328
    %v383 = vpop.permute.xlu0 %382
    %386 = vset.pattern.permute.xlu0 0
    %387 = vperm.xlu0 %386, %v329
    %v388 = vpop.permute.xlu0 %387
    %391 = vset.pattern.permute.xlu0 0
    %392 = vperm.xlu0 %391, %v330
    %v393 = vpop.permute.xlu0 %392
    %396 = vset.pattern.permute.xlu0 0
    %397 = vperm.xlu0 %396, %v331
    %v398 = vpop.permute.xlu0 %397
    %401 = vset.pattern.permute.xlu0 0
    %402 = vperm.xlu0 %401, %v332
    %v403 = vpop.permute.xlu0 %402
    %406 = vset.pattern.permute.xlu0 0
    %407 = vperm.xlu0 %406, %v333
    %v408 = vpop.permute.xlu0 %407
    %411 = vset.pattern.permute.xlu0 0
    %412 = vperm.xlu0 %411, %v334
    %v413 = vpop.permute.xlu0 %412
    %vm415 = vcmask 261120
    %v417 = vsel %vm415, %v303, 0
    %v420 = vsel %vm415, %v304, 0
    %v423 = vsel %vm415, %v305, 0
    %v426 = vsel %vm415, %v306, 0
    %v429 = vsel %vm415, %v307, 0
    %v432 = vsel %vm415, %v308, 0
    %v435 = vsel %vm415, %v309, 0
    %v438 = vsel %vm415, %v310, 0
    %v441 = vsel %vm415, %v311, 0
    %v444 = vsel %vm415, %v312, 0
    %v447 = vsel %vm415, %v313, 0
    %v450 = vsel %vm415, %v314, 0
    %v453 = vsel %vm415, %v315, 0
    %v456 = vsel %vm415, %v316, 0
    %v459 = vsel %vm415, %v317, 0
    %v462 = vsel %vm415, %v318, 0
    %464 = vmatprep.subr.mxu0 %v288
    %465 = vmatpush1.msra.mxu0 %v287
    %466 = vmatprep.subr.mxu0 %v292
    %467 = vmatpush1.msra.mxu0 %v291
    %468 = vmatprep.subr.mxu0 %v296
    %469 = vmatpush1.msra.mxu0 %v295
    %470 = vmatprep.subr.mxu0 %v300
    %471 = vmatpush1.msra.mxu0 %v299
    %472 = vmatprep.subr.mxu0 0.0
    %473 = vmatpush1.msra.mxu0 0.0
    %474 = vmatprep.subr.mxu0 0.0
    %475 = vmatpush1.msra.mxu0 0.0
    %476 = vmatprep.subr.mxu0 0.0
    %477 = vmatpush1.msra.mxu0 0.0
    %478 = vmatprep.subr.mxu0 0.0
    %479 = vmatpush1.msra.mxu0 0.0
    %480 = vmatprep.subr.mxu0 0.0
    %481 = vmatpush1.msra.mxu0 0.0
    %482 = vmatprep.subr.mxu0 0.0
    %483 = vmatpush1.msra.mxu0 0.0
    %484 = vmatprep.subr.mxu0 0.0
    %485 = vmatpush1.msra.mxu0 0.0
    %486 = vmatprep.subr.mxu0 0.0
    %487 = vmatpush1.msra.mxu0 0.0
    %488 = vmatprep.subr.mxu0 0.0
    %489 = vmatpush1.msra.mxu0 0.0
    %490 = vmatprep.subr.mxu0 0.0
    %491 = vmatpush1.msra.mxu0 0.0
    %492 = vmatprep.subr.mxu0 0.0
    %493 = vmatpush1.msra.mxu0 0.0
    %494 = vmatprep.subr.mxu0 0.0
    %495 = vmatpush1.msra.mxu0 0.0
    %496 = vmatprep.subr.mxu0 0.0
    %497 = vmatpush1.msra.mxu0 0.0
    %498 = vmatprep.subr.mxu0 0.0
    %499 = vmatpush1.msra.mxu0 0.0
    %500 = vmatprep.subr.mxu0 0.0
    %501 = vmatpush1.msra.mxu0 0.0
    %502 = vmatprep.subr.mxu0 0.0
    %503 = vmatpush1.msra.mxu0 0.0
    %504 = vmatprep.subr.mxu0 0.0
    %505 = vmatpush1.msra.mxu0 0.0
    %506 = vmatprep.subr.mxu0 0.0
    %507 = vmatpush1.msra.mxu0 0.0
    %508 = vmatprep.subr.mxu0 0.0
    %509 = vmatpush1.msra.mxu0 0.0
    %510 = vmatprep.subr.mxu0 0.0
    %511 = vmatpush1.msra.mxu0 0.0
    %512 = vmatprep.subr.mxu0 0.0
    %513 = vmatpush1.msra.mxu0 0.0
    %514 = vmatprep.subr.mxu0 0.0
    %515 = vmatpush1.msra.mxu0 0.0
    %516 = vmatprep.subr.mxu0 0.0
    %517 = vmatpush1.msra.mxu0 0.0
    %518 = vmatprep.subr.mxu0 0.0
    %519 = vmatpush1.msra.mxu0 0.0
    %520 = vmatprep.subr.mxu0 0.0
    %521 = vmatpush1.msra.mxu0 0.0
    %522 = vmatprep.subr.mxu0 0.0
    %523 = vmatpush1.msra.mxu0 0.0
    %524 = vmatprep.subr.mxu0 0.0
    %525 = vmatpush1.msra.mxu0 0.0
    %526 = vmatprep.subr.mxu0 0.0
    %527 = vmatpush1.msra.mxu0 0.0
    %528 = vmatprep.mubr.f32.mxu0 0.0
    %529 = vmatmul.mubr.f32.gmra.mrb[0].mxu0 %v417
    %v530 = vpop.f32.mrb[0].mxu0
    %v531 = vadd.f32 %v338, %v530
    %v532 = vpop.f32.mrb[0].mxu0
    %v533 = vadd.f32 %v338, %v532
    %534 = vmatprep.mubr.f32.mxu0 0.0
    %535 = vmatmul.mubr.f32.gmra.mrb[0].mxu0 %v420
    %v536 = vpop.f32.mrb[0].mxu0
    %v537 = vadd.f32 %v343, %v536
    %v538 = vpop.f32.mrb[0].mxu0
    %v539 = vadd.f32 %v343, %v538
    %540 = vmatprep.mubr.f32.mxu0 0.0
    %541 = vmatmul.mubr.f32.gmra.mrb[0].mxu0 %v423
    %v542 = vpop.f32.mrb[0].mxu0
    %v543 = vadd.f32 %v348, %v542
    %v544 = vpop.f32.mrb[0].mxu0
    %v545 = vadd.f32 %v348, %v544
    %546 = vmatprep.mubr.f32.mxu0 0.0
    %547 = vmatmul.mubr.f32.gmra.mrb[0].mxu0 %v426
    %v548 = vpop.f32.mrb[0].mxu0
    %v549 = vadd.f32 %v353, %v548
    %v550 = vpop.f32.mrb[0].mxu0
    %v551 = vadd.f32 %v353, %v550
    %552 = vmatprep.mubr.f32.mxu0 0.0
    %553 = vmatmul.mubr.f32.gmra.mrb[0].mxu0 %v429
    %v554 = vpop.f32.mrb[0].mxu0
    %v555 = vadd.f32 %v358, %v554
    %v556 = vpop.f32.mrb[0].mxu0
    %v557 = vadd.f32 %v358, %v556
    %558 = vmatprep.mubr.f32.mxu0 0.0
    %559 = vmatmul.mubr.f32.gmra.mrb[0].mxu0 %v432
    %v560 = vpop.f32.mrb[0].mxu0
    %v561 = vadd.f32 %v363, %v560
    %v562 = vpop.f32.mrb[0].mxu0
    %v563 = vadd.f32 %v363, %v562
    %564 = vmatprep.mubr.f32.mxu0 0.0
    %565 = vmatmul.mubr.f32.gmra.mrb[0].mxu0 %v435
    %v566 = vpop.f32.mrb[0].mxu0
    %v567 = vadd.f32 %v368, %v566
    %v568 = vpop.f32.mrb[0].mxu0
    %v569 = vadd.f32 %v368, %v568
    %570 = vmatprep.mubr.f32.mxu0 0.0
    %571 = vmatmul.mubr.f32.gmra.mrb[0].mxu0 %v438
    %v572 = vpop.f32.mrb[0].mxu0
    %v573 = vadd.f32 %v373, %v572
    %v574 = vpop.f32.mrb[0].mxu0
    %v575 = vadd.f32 %v373, %v574
    %576 = vmatprep.mubr.f32.mxu0 0.0
    %577 = vmatmul.mubr.f32.gmra.mrb[0].mxu0 %v441
    %v578 = vpop.f32.mrb[0].mxu0
    %v579 = vadd.f32 %v378, %v578
    %v580 = vpop.f32.mrb[0].mxu0
    %v581 = vadd.f32 %v378, %v580
    %582 = vmatprep.mubr.f32.mxu0 0.0
    %583 = vmatmul.mubr.f32.gmra.mrb[0].mxu0 %v444
    %v584 = vpop.f32.mrb[0].mxu0
    %v585 = vadd.f32 %v383, %v584
    %v586 = vpop.f32.mrb[0].mxu0
    %v587 = vadd.f32 %v383, %v586
    %588 = vmatprep.mubr.f32.mxu0 0.0
    %589 = vmatmul.mubr.f32.gmra.mrb[0].mxu0 %v447
    %v590 = vpop.f32.mrb[0].mxu0
    %v591 = vadd.f32 %v388, %v590
    %v592 = vpop.f32.mrb[0].mxu0
    %v593 = vadd.f32 %v388, %v592
    %594 = vmatprep.mubr.f32.mxu0 0.0
    %595 = vmatmul.mubr.f32.gmra.mrb[0].mxu0 %v450
    %v596 = vpop.f32.mrb[0].mxu0
    %v597 = vadd.f32 %v393, %v596
    %v598 = vpop.f32.mrb[0].mxu0
    %v599 = vadd.f32 %v393, %v598
    %600 = vmatprep.mubr.f32.mxu0 0.0
    %601 = vmatmul.mubr.f32.gmra.mrb[0].mxu0 %v453
    %v602 = vpop.f32.mrb[0].mxu0
    %v603 = vadd.f32 %v398, %v602
    %v604 = vpop.f32.mrb[0].mxu0
    %v605 = vadd.f32 %v398, %v604
    %606 = vmatprep.mubr.f32.mxu0 0.0
    %607 = vmatmul.mubr.f32.gmra.mrb[0].mxu0 %v456
    %v608 = vpop.f32.mrb[0].mxu0
    %v609 = vadd.f32 %v403, %v608
    %v610 = vpop.f32.mrb[0].mxu0
    %v611 = vadd.f32 %v403, %v610
    %612 = vmatprep.mubr.f32.mxu0 0.0
    %613 = vmatmul.mubr.f32.gmra.mrb[0].mxu0 %v459
    %v614 = vpop.f32.mrb[0].mxu0
    %v615 = vadd.f32 %v408, %v614
    %v616 = vpop.f32.mrb[0].mxu0
    %v617 = vadd.f32 %v408, %v616
    %618 = vmatprep.mubr.f32.mxu0 0.0
    %619 = vmatmul.mubr.f32.gmra.mrb[0].mxu0 %v462
    %v620 = vpop.f32.mrb[0].mxu0
    %v621 = vadd.f32 %v413, %v620
    %v622 = vpop.f32.mrb[0].mxu0
    %v623 = vadd.f32 %v413, %v622
    %624 = vdwg.mxu0
    %625 = vmatprep.subr.mxu0 %v290
    %626 = vmatpush1.msra.mxu0 %v289
    %627 = vmatprep.subr.mxu0 %v294
    %628 = vmatpush1.msra.mxu0 %v293
    %629 = vmatprep.subr.mxu0 %v298
    %630 = vmatpush1.msra.mxu0 %v297
    %631 = vmatprep.subr.mxu0 %v302
    %632 = vmatpush1.msra.mxu0 %v301
    %633 = vmatprep.subr.mxu0 0.0
    %634 = vmatpush1.msra.mxu0 0.0
    %635 = vmatprep.subr.mxu0 0.0
    %636 = vmatpush1.msra.mxu0 0.0
    %637 = vmatprep.subr.mxu0 0.0
    %638 = vmatpush1.msra.mxu0 0.0
    %639 = vmatprep.subr.mxu0 0.0
    %640 = vmatpush1.msra.mxu0 0.0
    %641 = vmatprep.subr.mxu0 0.0
    %642 = vmatpush1.msra.mxu0 0.0
    %643 = vmatprep.subr.mxu0 0.0
    %644 = vmatpush1.msra.mxu0 0.0
    %645 = vmatprep.subr.mxu0 0.0
    %646 = vmatpush1.msra.mxu0 0.0
    %647 = vmatprep.subr.mxu0 0.0
    %648 = vmatpush1.msra.mxu0 0.0
    %649 = vmatprep.subr.mxu0 0.0
    %650 = vmatpush1.msra.mxu0 0.0
    %651 = vmatprep.subr.mxu0 0.0
    %652 = vmatpush1.msra.mxu0 0.0
    %653 = vmatprep.subr.mxu0 0.0
    %654 = vmatpush1.msra.mxu0 0.0
    %655 = vmatprep.subr.mxu0 0.0
    %656 = vmatpush1.msra.mxu0 0.0
    %657 = vmatprep.subr.mxu0 0.0
    %658 = vmatpush1.msra.mxu0 0.0
    %659 = vmatprep.subr.mxu0 0.0
    %660 = vmatpush1.msra.mxu0 0.0
    %661 = vmatprep.subr.mxu0 0.0
    %662 = vmatpush1.msra.mxu0 0.0
    %663 = vmatprep.subr.mxu0 0.0
    %664 = vmatpush1.msra.mxu0 0.0
    %665 = vmatprep.subr.mxu0 0.0
    %666 = vmatpush1.msra.mxu0 0.0
    %667 = vmatprep.subr.mxu0 0.0
    %668 = vmatpush1.msra.mxu0 0.0
    %669 = vmatprep.subr.mxu0 0.0
    %670 = vmatpush1.msra.mxu0 0.0
    %671 = vmatprep.subr.mxu0 0.0
    %672 = vmatpush1.msra.mxu0 0.0
    %673 = vmatprep.subr.mxu0 0.0
    %674 = vmatpush1.msra.mxu0 0.0
    %675 = vmatprep.subr.mxu0 0.0
    %676 = vmatpush1.msra.mxu0 0.0
    %677 = vmatprep.subr.mxu0 0.0
    %678 = vmatpush1.msra.mxu0 0.0
    %679 = vmatprep.subr.mxu0 0.0
    %680 = vmatpush1.msra.mxu0 0.0
    %681 = vmatprep.subr.mxu0 0.0
    %682 = vmatpush1.msra.mxu0 0.0
    %683 = vmatprep.subr.mxu0 0.0
    %684 = vmatpush1.msra.mxu0 0.0
    %685 = vmatprep.subr.mxu0 0.0
    %686 = vmatpush1.msra.mxu0 0.0
    %687 = vmatprep.subr.mxu0 0.0
    %688 = vmatpush1.msra.mxu0 0.0
    %689 = vmatprep.mubr.f32.mxu0 0.0
    %690 = vmatmul.mubr.f32.gmra.mrb[0].mxu0 %v417
    %v691 = vpop.f32.mrb[0].mxu0
    %v692 = vadd.f32 %v338, %v691
    %v693 = vpop.f32.mrb[0].mxu0
    %v694 = vadd.f32 %v338, %v693
    %695 = vmatprep.mubr.f32.mxu0 0.0
    %696 = vmatmul.mubr.f32.gmra.mrb[0].mxu0 %v420
    %v697 = vpop.f32.mrb[0].mxu0
    %v698 = vadd.f32 %v343, %v697
    %v699 = vpop.f32.mrb[0].mxu0
    %v700 = vadd.f32 %v343, %v699
    %701 = vmatprep.mubr.f32.mxu0 0.0
    %702 = vmatmul.mubr.f32.gmra.mrb[0].mxu0 %v423
    %v703 = vpop.f32.mrb[0].mxu0
    %v704 = vadd.f32 %v348, %v703
    %v705 = vpop.f32.mrb[0].mxu0
    %v706 = vadd.f32 %v348, %v705
    %707 = vmatprep.mubr.f32.mxu0 0.0
    %708 = vmatmul.mubr.f32.gmra.mrb[0].mxu0 %v426
    %v709 = vpop.f32.mrb[0].mxu0
    %v710 = vadd.f32 %v353, %v709
    %v711 = vpop.f32.mrb[0].mxu0
    %v712 = vadd.f32 %v353, %v711
    %713 = vmatprep.mubr.f32.mxu0 0.0
    %714 = vmatmul.mubr.f32.gmra.mrb[0].mxu0 %v429
    %v715 = vpop.f32.mrb[0].mxu0
    %v716 = vadd.f32 %v358, %v715
    %v717 = vpop.f32.mrb[0].mxu0
    %v718 = vadd.f32 %v358, %v717
    %719 = vmatprep.mubr.f32.mxu0 0.0
    %720 = vmatmul.mubr.f32.gmra.mrb[0].mxu0 %v432
    %v721 = vpop.f32.mrb[0].mxu0
    %v722 = vadd.f32 %v363, %v721
    %v723 = vpop.f32.mrb[0].mxu0
    %v724 = vadd.f32 %v363, %v723
    %725 = vmatprep.mubr.f32.mxu0 0.0
    %726 = vmatmul.mubr.f32.gmra.mrb[0].mxu0 %v435
    %v727 = vpop.f32.mrb[0].mxu0
    %v728 = vadd.f32 %v368, %v727
    %v729 = vpop.f32.mrb[0].mxu0
    %v730 = vadd.f32 %v368, %v729
    %731 = vmatprep.mubr.f32.mxu0 0.0
    %732 = vmatmul.mubr.f32.gmra.mrb[0].mxu0 %v438
    %v733 = vpop.f32.mrb[0].mxu0
    %v734 = vadd.f32 %v373, %v733
    %v735 = vpop.f32.mrb[0].mxu0
    %v736 = vadd.f32 %v373, %v735
    %737 = vmatprep.mubr.f32.mxu0 0.0
    %738 = vmatmul.mubr.f32.gmra.mrb[0].mxu0 %v441
    %v739 = vpop.f32.mrb[0].mxu0
    %v740 = vadd.f32 %v378, %v739
    %v741 = vpop.f32.mrb[0].mxu0
    %v742 = vadd.f32 %v378, %v741
    %743 = vmatprep.mubr.f32.mxu0 0.0
    %744 = vmatmul.mubr.f32.gmra.mrb[0].mxu0 %v444
    %v745 = vpop.f32.mrb[0].mxu0
    %v746 = vadd.f32 %v383, %v745
    %v747 = vpop.f32.mrb[0].mxu0
    %v748 = vadd.f32 %v383, %v747
    %749 = vmatprep.mubr.f32.mxu0 0.0
    %750 = vmatmul.mubr.f32.gmra.mrb[0].mxu0 %v447
    %v751 = vpop.f32.mrb[0].mxu0
    %v752 = vadd.f32 %v388, %v751
    %v753 = vpop.f32.mrb[0].mxu0
    %v754 = vadd.f32 %v388, %v753
    %755 = vmatprep.mubr.f32.mxu0 0.0
    %756 = vmatmul.mubr.f32.gmra.mrb[0].mxu0 %v450
    %v757 = vpop.f32.mrb[0].mxu0
    %v758 = vadd.f32 %v393, %v757
    %v759 = vpop.f32.mrb[0].mxu0
    %v760 = vadd.f32 %v393, %v759
    %761 = vmatprep.mubr.f32.mxu0 0.0
    %762 = vmatmul.mubr.f32.gmra.mrb[0].mxu0 %v453
    %v763 = vpop.f32.mrb[0].mxu0
    %v764 = vadd.f32 %v398, %v763
    %v765 = vpop.f32.mrb[0].mxu0
    %v766 = vadd.f32 %v398, %v765
    %767 = vmatprep.mubr.f32.mxu0 0.0
    %768 = vmatmul.mubr.f32.gmra.mrb[0].mxu0 %v456
    %v769 = vpop.f32.mrb[0].mxu0
    %v770 = vadd.f32 %v403, %v769
    %v771 = vpop.f32.mrb[0].mxu0
    %v772 = vadd.f32 %v403, %v771
    %773 = vmatprep.mubr.f32.mxu0 0.0
    %774 = vmatmul.mubr.f32.gmra.mrb[0].mxu0 %v459
    %v775 = vpop.f32.mrb[0].mxu0
    %v776 = vadd.f32 %v408, %v775
    %v777 = vpop.f32.mrb[0].mxu0
    %v778 = vadd.f32 %v408, %v777
    %779 = vmatprep.mubr.f32.mxu0 0.0
    %780 = vmatmul.mubr.f32.gmra.mrb[0].mxu0 %v462
    %v781 = vpop.f32.mrb[0].mxu0
    %v782 = vadd.f32 %v413, %v781
    %v783 = vpop.f32.mrb[0].mxu0
    %v784 = vadd.f32 %v413, %v783
    %785 = vdwg.mxu0
    %v786 = vmul.f32 %v531, 0.01
    %v787 = vmul.f32 %v533, 0.01
    %v788 = vmul.f32 %v692, 0.01
    %v789 = vmul.f32 %v694, 0.01
    %v790 = vmul.f32 %v537, 0.01
    %v791 = vmul.f32 %v539, 0.01
    %v792 = vmul.f32 %v698, 0.01
    %v793 = vmul.f32 %v700, 0.01
    %v794 = vmul.f32 %v543, 0.01
    %v795 = vmul.f32 %v545, 0.01
    %v796 = vmul.f32 %v704, 0.01
    %v797 = vmul.f32 %v706, 0.01
    %v798 = vmul.f32 %v549, 0.01
    %v799 = vmul.f32 %v551, 0.01
    %v800 = vmul.f32 %v710, 0.01
    %v801 = vmul.f32 %v712, 0.01
    %v802 = vmul.f32 %v555, 0.01
    %v803 = vmul.f32 %v557, 0.01
    %v804 = vmul.f32 %v716, 0.01
    %v805 = vmul.f32 %v718, 0.01
    %v806 = vmul.f32 %v561, 0.01
    %v807 = vmul.f32 %v563, 0.01
    %v808 = vmul.f32 %v722, 0.01
    %v809 = vmul.f32 %v724, 0.01
    %v810 = vmul.f32 %v567, 0.01
    %v811 = vmul.f32 %v569, 0.01
    %v812 = vmul.f32 %v728, 0.01
    %v813 = vmul.f32 %v730, 0.01
    %v814 = vmul.f32 %v573, 0.01
    %v815 = vmul.f32 %v575, 0.01
    %v816 = vmul.f32 %v734, 0.01
    %v817 = vmul.f32 %v736, 0.01
    %v818 = vmul.f32 %v579, 0.01
    %v819 = vmul.f32 %v581, 0.01
    %v820 = vmul.f32 %v740, 0.01
    %v821 = vmul.f32 %v742, 0.01
    %v822 = vmul.f32 %v585, 0.01
    %v823 = vmul.f32 %v587, 0.01
    %v824 = vmul.f32 %v746, 0.01
    %v825 = vmul.f32 %v748, 0.01
    %v826 = vmul.f32 %v591, 0.01
    %v827 = vmul.f32 %v593, 0.01
    %v828 = vmul.f32 %v752, 0.01
    %v829 = vmul.f32 %v754, 0.01
    %v830 = vmul.f32 %v597, 0.01
    %v831 = vmul.f32 %v599, 0.01
    %v832 = vmul.f32 %v758, 0.01
    %v833 = vmul.f32 %v760, 0.01
    %v834 = vmul.f32 %v603, 0.01
    %v835 = vmul.f32 %v605, 0.01
    %v836 = vmul.f32 %v764, 0.01
    %v837 = vmul.f32 %v766, 0.01
    %v838 = vmul.f32 %v609, 0.01
    %v839 = vmul.f32 %v611, 0.01
    %v840 = vmul.f32 %v770, 0.01
    %v841 = vmul.f32 %v772, 0.01
    %v842 = vmul.f32 %v615, 0.01
    %v843 = vmul.f32 %v617, 0.01
    %v844 = vmul.f32 %v776, 0.01
    %v845 = vmul.f32 %v778, 0.01
    %v846 = vmul.f32 %v621, 0.01
    %v847 = vmul.f32 %v623, 0.01
    %v848 = vmul.f32 %v782, 0.01
    %v849 = vmul.f32 %v784, 0.01
    %v850 = vmax.f32 %v531, %v786
    %v851 = vmax.f32 %v533, %v787
    %v852 = vmax.f32 %v692, %v788
    %v853 = vmax.f32 %v694, %v789
    %v854 = vmax.f32 %v537, %v790
    %v855 = vmax.f32 %v539, %v791
    %v856 = vmax.f32 %v698, %v792
    %v857 = vmax.f32 %v700, %v793
    %v858 = vmax.f32 %v543, %v794
    %v859 = vmax.f32 %v545, %v795
    %v860 = vmax.f32 %v704, %v796
    %v861 = vmax.f32 %v706, %v797
    %v862 = vmax.f32 %v549, %v798
    %v863 = vmax.f32 %v551, %v799
    %v864 = vmax.f32 %v710, %v800
    %v865 = vmax.f32 %v712, %v801
    %v866 = vmax.f32 %v555, %v802
    %v867 = vmax.f32 %v557, %v803
    %v868 = vmax.f32 %v716, %v804
    %v869 = vmax.f32 %v718, %v805
    %v870 = vmax.f32 %v561, %v806
    %v871 = vmax.f32 %v563, %v807
    %v872 = vmax.f32 %v722, %v808
    %v873 = vmax.f32 %v724, %v809
    %v874 = vmax.f32 %v567, %v810
    %v875 = vmax.f32 %v569, %v811
    %v876 = vmax.f32 %v728, %v812
    %v877 = vmax.f32 %v730, %v813
    %v878 = vmax.f32 %v573, %v814
    %v879 = vmax.f32 %v575, %v815
    %v880 = vmax.f32 %v734, %v816
    %v881 = vmax.f32 %v736, %v817
    %v882 = vmax.f32 %v579, %v818
    %v883 = vmax.f32 %v581, %v819
    %v884 = vmax.f32 %v740, %v820
    %v885 = vmax.f32 %v742, %v821
    %v886 = vmax.f32 %v585, %v822
    %v887 = vmax.f32 %v587, %v823
    %v888 = vmax.f32 %v746, %v824
    %v889 = vmax.f32 %v748, %v825
    %v890 = vmax.f32 %v591, %v826
    %v891 = vmax.f32 %v593, %v827
    %v892 = vmax.f32 %v752, %v828
    %v893 = vmax.f32 %v754, %v829
    %v894 = vmax.f32 %v597, %v830
    %v895 = vmax.f32 %v599, %v831
    %v896 = vmax.f32 %v758, %v832
    %v897 = vmax.f32 %v760, %v833
    %v898 = vmax.f32 %v603, %v834
    %v899 = vmax.f32 %v605, %v835
    %v900 = vmax.f32 %v764, %v836
    %v901 = vmax.f32 %v766, %v837
    %v902 = vmax.f32 %v609, %v838
    %v903 = vmax.f32 %v611, %v839
    %v904 = vmax.f32 %v770, %v840
    %v905 = vmax.f32 %v772, %v841
    %v906 = vmax.f32 %v615, %v842
    %v907 = vmax.f32 %v617, %v843
    %v908 = vmax.f32 %v776, %v844
    %v909 = vmax.f32 %v778, %v845
    %v910 = vmax.f32 %v621, %v846
    %v911 = vmax.f32 %v623, %v847
    %v912 = vmax.f32 %v782, %v848
    %v913 = vmax.f32 %v784, %v849
    %v914 = vld [vmem:[%s5] sm:$0xff]
    %v915 = vld [vmem:[%s5 + $0x8] sm:$0xff]
    %v916 = vld [vmem:[%s5 + $0x10] sm:$0xff]
    %v917 = vld [vmem:[%s5 + $0x18] sm:$0xff]
    %v918 = vld [vmem:[%s6] sm:$0xff]
    %v919 = vld [vmem:[%s6 + $0x8] sm:$0xff]
    %v920 = vld [vmem:[%s6 + $0x10] sm:$0xff]
    %v921 = vld [vmem:[%s6 + $0x18] sm:$0xff]
    %923 = vset.pattern.permute.xlu0 0
    %924 = vperm.xlu0 %923, %v918
    %v925 = vpop.permute.xlu0 %924
    %928 = vset.pattern.permute.xlu0 0
    %929 = vperm.xlu0 %928, %v919
    %v930 = vpop.permute.xlu0 %929
    %933 = vset.pattern.permute.xlu0 0
    %934 = vperm.xlu0 %933, %v920
    %v935 = vpop.permute.xlu0 %934
    %938 = vset.pattern.permute.xlu0 0
    %939 = vperm.xlu0 %938, %v921
    %v940 = vpop.permute.xlu0 %939
    %942 = vmatprep.subr.mxu0 %v851
    %943 = vmatpush1.msra.mxu0 %v850
    %944 = vmatprep.subr.mxu0 %v855
    %945 = vmatpush1.msra.mxu0 %v854
    %946 = vmatprep.subr.mxu0 %v859
    %947 = vmatpush1.msra.mxu0 %v858
    %948 = vmatprep.subr.mxu0 %v863
    %949 = vmatpush1.msra.mxu0 %v862
    %950 = vmatprep.subr.mxu0 %v867
    %951 = vmatpush1.msra.mxu0 %v866
    %952 = vmatprep.subr.mxu0 %v871
    %953 = vmatpush1.msra.mxu0 %v870
    %954 = vmatprep.subr.mxu0 %v875
    %955 = vmatpush1.msra.mxu0 %v874
    %956 = vmatprep.subr.mxu0 %v879
    %957 = vmatpush1.msra.mxu0 %v878
    %958 = vmatprep.subr.mxu0 %v883
    %959 = vmatpush1.msra.mxu0 %v882
    %960 = vmatprep.subr.mxu0 %v887
    %961 = vmatpush1.msra.mxu0 %v886
    %962 = vmatprep.subr.mxu0 %v891
    %963 = vmatpush1.msra.mxu0 %v890
    %964 = vmatprep.subr.mxu0 %v895
    %965 = vmatpush1.msra.mxu0 %v894
    %966 = vmatprep.subr.mxu0 %v899
    %967 = vmatpush1.msra.mxu0 %v898
    %968 = vmatprep.subr.mxu0 %v903
    %969 = vmatpush1.msra.mxu0 %v902
    %970 = vmatprep.subr.mxu0 %v907
    %971 = vmatpush1.msra.mxu0 %v906
    %972 = vmatprep.subr.mxu0 %v911
    %973 = vmatpush1.msra.mxu0 %v910
    %974 = vmatprep.subr.mxu0 0.0
    %975 = vmatpush1.msra.mxu0 0.0
    %976 = vmatprep.subr.mxu0 0.0
    %977 = vmatpush1.msra.mxu0 0.0
    %978 = vmatprep.subr.mxu0 0.0
    %979 = vmatpush1.msra.mxu0 0.0
    %980 = vmatprep.subr.mxu0 0.0
    %981 = vmatpush1.msra.mxu0 0.0
    %982 = vmatprep.subr.mxu0 0.0
    %983 = vmatpush1.msra.mxu0 0.0
    %984 = vmatprep.subr.mxu0 0.0
    %985 = vmatpush1.msra.mxu0 0.0
    %986 = vmatprep.subr.mxu0 0.0
    %987 = vmatpush1.msra.mxu0 0.0
    %988 = vmatprep.subr.mxu0 0.0
    %989 = vmatpush1.msra.mxu0 0.0
    %990 = vmatprep.subr.mxu0 0.0
    %991 = vmatpush1.msra.mxu0 0.0
    %992 = vmatprep.subr.mxu0 0.0
    %993 = vmatpush1.msra.mxu0 0.0
    %994 = vmatprep.subr.mxu0 0.0
    %995 = vmatpush1.msra.mxu0 0.0
    %996 = vmatprep.subr.mxu0 0.0
    %997 = vmatpush1.msra.mxu0 0.0
    %998 = vmatprep.subr.mxu0 0.0
    %999 = vmatpush1.msra.mxu0 0.0
    %1000 = vmatprep.subr.mxu0 0.0
    %1001 = vmatpush1.msra.mxu0 0.0
    %1002 = vmatprep.subr.mxu0 0.0
    %1003 = vmatpush1.msra.mxu0 0.0
    %1004 = vmatprep.subr.mxu0 0.0
    %1005 = vmatpush1.msra.mxu0 0.0
    %1006 = vmatprep.mubr.f32.mxu0 0.0
    %1007 = vmatmul.mubr.f32.gmra.mrb[0].mxu0 %v914
    %v1008 = vpop.f32.mrb[0].mxu0
    %v1009 = vadd.f32 %v925, %v1008
    %v1010 = vpop.f32.mrb[0].mxu0
    %v1011 = vadd.f32 %v925, %v1010
    %1012 = vmatprep.mubr.f32.mxu0 0.0
    %1013 = vmatmul.mubr.f32.gmra.mrb[0].mxu0 %v915
    %v1014 = vpop.f32.mrb[0].mxu0
    %v1015 = vadd.f32 %v930, %v1014
    %v1016 = vpop.f32.mrb[0].mxu0
    %v1017 = vadd.f32 %v930, %v1016
    %1018 = vmatprep.mubr.f32.mxu0 0.0
    %1019 = vmatmul.mubr.f32.gmra.mrb[0].mxu0 %v916
    %v1020 = vpop.f32.mrb[0].mxu0
    %v1021 = vadd.f32 %v935, %v1020
    %v1022 = vpop.f32.mrb[0].mxu0
    %v1023 = vadd.f32 %v935, %v1022
    %1024 = vmatprep.mubr.f32.mxu0 0.0
    %1025 = vmatmul.mubr.f32.gmra.mrb[0].mxu0 %v917
    %v1026 = vpop.f32.mrb[0].mxu0
    %v1027 = vadd.f32 %v940, %v1026
    %v1028 = vpop.f32.mrb[0].mxu0
    %v1029 = vadd.f32 %v940, %v1028
    %1030 = vdwg.mxu0
    %1031 = vmatprep.subr.mxu0 %v853
    %1032 = vmatpush1.msra.mxu0 %v852
    %1033 = vmatprep.subr.mxu0 %v857
    %1034 = vmatpush1.msra.mxu0 %v856
    %1035 = vmatprep.subr.mxu0 %v861
    %1036 = vmatpush1.msra.mxu0 %v860
    %1037 = vmatprep.subr.mxu0 %v865
    %1038 = vmatpush1.msra.mxu0 %v864
    %1039 = vmatprep.subr.mxu0 %v869
    %1040 = vmatpush1.msra.mxu0 %v868
    %1041 = vmatprep.subr.mxu0 %v873
    %1042 = vmatpush1.msra.mxu0 %v872
    %1043 = vmatprep.subr.mxu0 %v877
    %1044 = vmatpush1.msra.mxu0 %v876
    %1045 = vmatprep.subr.mxu0 %v881
    %1046 = vmatpush1.msra.mxu0 %v880
    %1047 = vmatprep.subr.mxu0 %v885
    %1048 = vmatpush1.msra.mxu0 %v884
    %1049 = vmatprep.subr.mxu0 %v889
    %1050 = vmatpush1.msra.mxu0 %v888
    %1051 = vmatprep.subr.mxu0 %v893
    %1052 = vmatpush1.msra.mxu0 %v892
    %1053 = vmatprep.subr.mxu0 %v897
    %1054 = vmatpush1.msra.mxu0 %v896
    %1055 = vmatprep.subr.mxu0 %v901
    %1056 = vmatpush1.msra.mxu0 %v900
    %1057 = vmatprep.subr.mxu0 %v905
    %1058 = vmatpush1.msra.mxu0 %v904
    %1059 = vmatprep.subr.mxu0 %v909
    %1060 = vmatpush1.msra.mxu0 %v908
    %1061 = vmatprep.subr.mxu0 %v913
    %1062 = vmatpush1.msra.mxu0 %v912
    %1063 = vmatprep.subr.mxu0 0.0
    %1064 = vmatpush1.msra.mxu0 0.0
    %1065 = vmatprep.subr.mxu0 0.0
    %1066 = vmatpush1.msra.mxu0 0.0
    %1067 = vmatprep.subr.mxu0 0.0
    %1068 = vmatpush1.msra.mxu0 0.0
    %1069 = vmatprep.subr.mxu0 0.0
    %1070 = vmatpush1.msra.mxu0 0.0
    %1071 = vmatprep.subr.mxu0 0.0
    %1072 = vmatpush1.msra.mxu0 0.0
    %1073 = vmatprep.subr.mxu0 0.0
    %1074 = vmatpush1.msra.mxu0 0.0
    %1075 = vmatprep.subr.mxu0 0.0
    %1076 = vmatpush1.msra.mxu0 0.0
    %1077 = vmatprep.subr.mxu0 0.0
    %1078 = vmatpush1.msra.mxu0 0.0
    %1079 = vmatprep.subr.mxu0 0.0
    %1080 = vmatpush1.msra.mxu0 0.0
    %1081 = vmatprep.subr.mxu0 0.0
    %1082 = vmatpush1.msra.mxu0 0.0
    %1083 = vmatprep.subr.mxu0 0.0
    %1084 = vmatpush1.msra.mxu0 0.0
    %1085 = vmatprep.subr.mxu0 0.0
    %1086 = vmatpush1.msra.mxu0 0.0
    %1087 = vmatprep.subr.mxu0 0.0
    %1088 = vmatpush1.msra.mxu0 0.0
    %1089 = vmatprep.subr.mxu0 0.0
    %1090 = vmatpush1.msra.mxu0 0.0
    %1091 = vmatprep.subr.mxu0 0.0
    %1092 = vmatpush1.msra.mxu0 0.0
    %1093 = vmatprep.subr.mxu0 0.0
    %1094 = vmatpush1.msra.mxu0 0.0
    %1095 = vmatprep.mubr.f32.mxu0 0.0
    %1096 = vmatmul.mubr.f32.gmra.mrb[0].mxu0 %v914
    %v1097 = vpop.f32.mrb[0].mxu0
    %v1098 = vadd.f32 %v925, %v1097
    %v1099 = vpop.f32.mrb[0].mxu0
    %v1100 = vadd.f32 %v925, %v1099
    %1101 = vmatprep.mubr.f32.mxu0 0.0
    %1102 = vmatmul.mubr.f32.gmra.mrb[0].mxu0 %v915
    %v1103 = vpop.f32.mrb[0].mxu0
    %v1104 = vadd.f32 %v930, %v1103
    %v1105 = vpop.f32.mrb[0].mxu0
    %v1106 = vadd.f32 %v930, %v1105
    %1107 = vmatprep.mubr.f32.mxu0 0.0
    %1108 = vmatmul.mubr.f32.gmra.mrb[0].mxu0 %v916
    %v1109 = vpop.f32.mrb[0].mxu0
    %v1110 = vadd.f32 %v935, %v1109
    %v1111 = vpop.f32.mrb[0].mxu0
    %v1112 = vadd.f32 %v935, %v1111
    %1113 = vmatprep.mubr.f32.mxu0 0.0
    %1114 = vmatmul.mubr.f32.gmra.mrb[0].mxu0 %v917
    %v1115 = vpop.f32.mrb[0].mxu0
    %v1116 = vadd.f32 %v940, %v1115
    %v1117 = vpop.f32.mrb[0].mxu0
    %v1118 = vadd.f32 %v940, %v1117
    %1119 = vdwg.mxu0
    %v1120 = vmul.f32 %v1009, 0.01
    %v1121 = vmul.f32 %v1011, 0.01
    %v1122 = vmul.f32 %v1098, 0.01
    %v1123 = vmul.f32 %v1100, 0.01
    %v1124 = vmul.f32 %v1015, 0.01
    %v1125 = vmul.f32 %v1017, 0.01
    %v1126 = vmul.f32 %v1104, 0.01
    %v1127 = vmul.f32 %v1106, 0.01
    %v1128 = vmul.f32 %v1021, 0.01
    %v1129 = vmul.f32 %v1023, 0.01
    %v1130 = vmul.f32 %v1110, 0.01
    %v1131 = vmul.f32 %v1112, 0.01
    %v1132 = vmul.f32 %v1027, 0.01
    %v1133 = vmul.f32 %v1029, 0.01
    %v1134 = vmul.f32 %v1116, 0.01
    %v1135 = vmul.f32 %v1118, 0.01
    %v1136 = vmax.f32 %v1009, %v1120
    %v1137 = vmax.f32 %v1011, %v1121
    %v1138 = vmax.f32 %v1098, %v1122
    %v1139 = vmax.f32 %v1100, %v1123
    %v1140 = vmax.f32 %v1015, %v1124
    %v1141 = vmax.f32 %v1017, %v1125
    %v1142 = vmax.f32 %v1104, %v1126
    %v1143 = vmax.f32 %v1106, %v1127
    %v1144 = vmax.f32 %v1021, %v1128
    %v1145 = vmax.f32 %v1023, %v1129
    %v1146 = vmax.f32 %v1110, %v1130
    %v1147 = vmax.f32 %v1112, %v1131
    %v1148 = vmax.f32 %v1027, %v1132
    %v1149 = vmax.f32 %v1029, %v1133
    %v1150 = vmax.f32 %v1116, %v1134
    %v1151 = vmax.f32 %v1118, %v1135
    %v1152 = vld [vmem:[%s7] sm:$0x1]
    %v1153 = vld [vmem:[#allocation2] sm:$0x1]
    %1155 = vset.pattern.permute.xlu0 0
    %1156 = vperm.xlu0 %1155, %v1153
    %v1157 = vpop.permute.xlu0 %1156
    %v1159 = vlaneseq
    %v1160 = vshrl.u32 %v1159, 7
    %v1161 = vsub.s32 0, %v1160
    %v1162 = vrot.slane %v1157, %v1161
    %v1164 = vsel %vm415, %v1152, 0
    %1166 = vmatprep.subr.mxu0 %v1137
    %1167 = vmatpush1.msra.mxu0 %v1136
    %1168 = vmatprep.subr.mxu0 %v1141
    %1169 = vmatpush1.msra.mxu0 %v1140
    %1170 = vmatprep.subr.mxu0 %v1145
    %1171 = vmatpush1.msra.mxu0 %v1144
    %1172 = vmatprep.subr.mxu0 %v1149
    %1173 = vmatpush1.msra.mxu0 %v1148
    %1174 = vmatprep.subr.mxu0 0.0
    %1175 = vmatpush1.msra.mxu0 0.0
    %1176 = vmatprep.subr.mxu0 0.0
    %1177 = vmatpush1.msra.mxu0 0.0
    %1178 = vmatprep.subr.mxu0 0.0
    %1179 = vmatpush1.msra.mxu0 0.0
    %1180 = vmatprep.subr.mxu0 0.0
    %1181 = vmatpush1.msra.mxu0 0.0
    %1182 = vmatprep.subr.mxu0 0.0
    %1183 = vmatpush1.msra.mxu0 0.0
    %1184 = vmatprep.subr.mxu0 0.0
    %1185 = vmatpush1.msra.mxu0 0.0
    %1186 = vmatprep.subr.mxu0 0.0
    %1187 = vmatpush1.msra.mxu0 0.0
    %1188 = vmatprep.subr.mxu0 0.0
    %1189 = vmatpush1.msra.mxu0 0.0
    %1190 = vmatprep.subr.mxu0 0.0
    %1191 = vmatpush1.msra.mxu0 0.0
    %1192 = vmatprep.subr.mxu0 0.0
    %1193 = vmatpush1.msra.mxu0 0.0
    %1194 = vmatprep.subr.mxu0 0.0
    %1195 = vmatpush1.msra.mxu0 0.0
    %1196 = vmatprep.subr.mxu0 0.0
    %1197 = vmatpush1.msra.mxu0 0.0
    %1198 = vmatprep.subr.mxu0 0.0
    %1199 = vmatpush1.msra.mxu0 0.0
    %1200 = vmatprep.subr.mxu0 0.0
    %1201 = vmatpush1.msra.mxu0 0.0
    %1202 = vmatprep.subr.mxu0 0.0
    %1203 = vmatpush1.msra.mxu0 0.0
    %1204 = vmatprep.subr.mxu0 0.0
    %1205 = vmatpush1.msra.mxu0 0.0
    %1206 = vmatprep.subr.mxu0 0.0
    %1207 = vmatpush1.msra.mxu0 0.0
    %1208 = vmatprep.subr.mxu0 0.0
    %1209 = vmatpush1.msra.mxu0 0.0
    %1210 = vmatprep.subr.mxu0 0.0
    %1211 = vmatpush1.msra.mxu0 0.0
    %1212 = vmatprep.subr.mxu0 0.0
    %1213 = vmatpush1.msra.mxu0 0.0
    %1214 = vmatprep.subr.mxu0 0.0
    %1215 = vmatpush1.msra.mxu0 0.0
    %1216 = vmatprep.subr.mxu0 0.0
    %1217 = vmatpush1.msra.mxu0 0.0
    %1218 = vmatprep.subr.mxu0 0.0
    %1219 = vmatpush1.msra.mxu0 0.0
    %1220 = vmatprep.subr.mxu0 0.0
    %1221 = vmatpush1.msra.mxu0 0.0
    %1222 = vmatprep.subr.mxu0 0.0
    %1223 = vmatpush1.msra.mxu0 0.0
    %1224 = vmatprep.subr.mxu0 0.0
    %1225 = vmatpush1.msra.mxu0 0.0
    %1226 = vmatprep.subr.mxu0 0.0
    %1227 = vmatpush1.msra.mxu0 0.0
    %1228 = vmatprep.subr.mxu0 0.0
    %1229 = vmatpush1.msra.mxu0 0.0
    %1230 = vmatprep.mubr.f32.mxu0 0.0
    %1231 = vmatmul.mubr.f32.gmra.mrb[0].mxu0 %v1164
    %v1232 = vpop.f32.mrb[0].mxu0
    %v1233 = vadd.f32 %v1162, %v1232
    %v1234 = vpop.f32.mrb[0].mxu0
    %v1235 = vadd.f32 %v1162, %v1234
    %1236 = vdwg.mxu0
    %1237 = vmatprep.subr.mxu0 %v1139
    %1238 = vmatpush1.msra.mxu0 %v1138
    %1239 = vmatprep.subr.mxu0 %v1143
    %1240 = vmatpush1.msra.mxu0 %v1142
    %1241 = vmatprep.subr.mxu0 %v1147
    %1242 = vmatpush1.msra.mxu0 %v1146
    %1243 = vmatprep.subr.mxu0 %v1151
    %1244 = vmatpush1.msra.mxu0 %v1150
    %1245 = vmatprep.subr.mxu0 0.0
    %1246 = vmatpush1.msra.mxu0 0.0
    %1247 = vmatprep.subr.mxu0 0.0
    %1248 = vmatpush1.msra.mxu0 0.0
    %1249 = vmatprep.subr.mxu0 0.0
    %1250 = vmatpush1.msra.mxu0 0.0
    %1251 = vmatprep.subr.mxu0 0.0
    %1252 = vmatpush1.msra.mxu0 0.0
    %1253 = vmatprep.subr.mxu0 0.0
    %1254 = vmatpush1.msra.mxu0 0.0
    %1255 = vmatprep.subr.mxu0 0.0
    %1256 = vmatpush1.msra.mxu0 0.0
    %1257 = vmatprep.subr.mxu0 0.0
    %1258 = vmatpush1.msra.mxu0 0.0
    %1259 = vmatprep.subr.mxu0 0.0
    %1260 = vmatpush1.msra.mxu0 0.0
    %1261 = vmatprep.subr.mxu0 0.0
    %1262 = vmatpush1.msra.mxu0 0.0
    %1263 = vmatprep.subr.mxu0 0.0
    %1264 = vmatpush1.msra.mxu0 0.0
    %1265 = vmatprep.subr.mxu0 0.0
    %1266 = vmatpush1.msra.mxu0 0.0
    %1267 = vmatprep.subr.mxu0 0.0
    %1268 = vmatpush1.msra.mxu0 0.0
    %1269 = vmatprep.subr.mxu0 0.0
    %1270 = vmatpush1.msra.mxu0 0.0
    %1271 = vmatprep.subr.mxu0 0.0
    %1272 = vmatpush1.msra.mxu0 0.0
    %1273 = vmatprep.subr.mxu0 0.0
    %1274 = vmatpush1.msra.mxu0 0.0
    %1275 = vmatprep.subr.mxu0 0.0
    %1276 = vmatpush1.msra.mxu0 0.0
    %1277 = vmatprep.subr.mxu0 0.0
    %1278 = vmatpush1.msra.mxu0 0.0
    %1279 = vmatprep.subr.mxu0 0.0
    %1280 = vmatpush1.msra.mxu0 0.0
    %1281 = vmatprep.subr.mxu0 0.0
    %1282 = vmatpush1.msra.mxu0 0.0
    %1283 = vmatprep.subr.mxu0 0.0
    %1284 = vmatpush1.msra.mxu0 0.0
    %1285 = vmatprep.subr.mxu0 0.0
    %1286 = vmatpush1.msra.mxu0 0.0
    %1287 = vmatprep.subr.mxu0 0.0
    %1288 = vmatpush1.msra.mxu0 0.0
    %1289 = vmatprep.subr.mxu0 0.0
    %1290 = vmatpush1.msra.mxu0 0.0
    %1291 = vmatprep.subr.mxu0 0.0
    %1292 = vmatpush1.msra.mxu0 0.0
    %1293 = vmatprep.subr.mxu0 0.0
    %1294 = vmatpush1.msra.mxu0 0.0
    %1295 = vmatprep.subr.mxu0 0.0
    %1296 = vmatpush1.msra.mxu0 0.0
    %1297 = vmatprep.subr.mxu0 0.0
    %1298 = vmatpush1.msra.mxu0 0.0
    %1299 = vmatprep.subr.mxu0 0.0
    %1300 = vmatpush1.msra.mxu0 0.0
    %1301 = vmatprep.mubr.f32.mxu0 0.0
    %1302 = vmatmul.mubr.f32.gmra.mrb[0].mxu0 %v1164
    %v1303 = vpop.f32.mrb[0].mxu0
    %v1304 = vadd.f32 %v1162, %v1303
    %v1305 = vpop.f32.mrb[0].mxu0
    %v1306 = vadd.f32 %v1162, %v1305
    %1307 = vdwg.mxu0
    %v1308 = vxor.u32 %v1233, 2147483648
    %v1309 = vxor.u32 %v1235, 2147483648
    %v1310 = vxor.u32 %v1304, 2147483648
    %v1311 = vxor.u32 %v1306, 2147483648
    %v1312 = vmul.f32 %v1308, 1.442695
    %v1313 = vpow.pop %v1312
    %v1314 = vmul.f32 %v1309, 1.442695
    %v1315 = vpow.pop %v1314
    %v1316 = vmul.f32 %v1310, 1.442695
    %v1317 = vpow.pop %v1316
    %v1318 = vmul.f32 %v1311, 1.442695
    %v1319 = vpow.pop %v1318
    %v1320 = vadd.f32 %v1313, 1.0
    %v1321 = vadd.f32 %v1315, 1.0
    %v1322 = vadd.f32 %v1317, 1.0
    %v1323 = vadd.f32 %v1319, 1.0
    %v1324 = vrcp.pop %v1320
    %v1325 = vmul.f32 1.0, %v1324
    %v1326 = vrcp.pop %v1321
    %v1327 = vmul.f32 1.0, %v1326
    %v1328 = vrcp.pop %v1322
    %v1329 = vmul.f32 1.0, %v1328
    %v1330 = vrcp.pop %v1323
    %v1331 = vmul.f32 1.0, %v1330
    %v1336 = vcombine.low %v1325, %v1327
    %v1337 = vcombine.low %v1329, %v1331
    %v1339 = vunpack.c.l.s4 1966171168
    %v1340 = vunpack.c.0.s8 %v1339
    %v1341 = vlaneseq
    %v1342 = vshrl.u32 %v1341, 7
    %v1343 = vsub.s32 %v1340, %v1342
    %v1344 = vrot.slane %v1336, %v1343
    %v1346 = vunpack.c.l.s4 1966171168
    %v1347 = vunpack.c.0.s8 %v1346
    %v1348 = vlaneseq
    %v1349 = vshrl.u32 %v1348, 7
    %v1350 = vsub.s32 %v1347, %v1349
    %v1351 = vrot.slane %v1337, %v1350
    %v1352 = vcombine.low %v1344, %v1351
    %v1354 = vunpack.c.l.s4 1966171168
    %v1355 = vunpack.c.0.s8 %v1354
    %v1356 = vlaneseq
    %v1357 = vshrl.u32 %v1356, 7
    %v1358 = vsub.s32 %v1355, %v1357
    %v1359 = vrot.slane %v1352, %v1358
    %v1361 = vlaneseq
    %vm1362 = vcmp.ge.s32.totalorder %v1361, 0
    %vm1363 = vcmp.lt.s32.totalorder %v1361, 512
    %vm1364 = vmand %vm1362, %vm1363
    %1365 = vst.msk [vmem:[#allocation3] sm:$0xf] %vm1364, %v1359
    // Predicated region
    $region38: #{tpu_custom_call.1} parent=1 // pred_check
      _
    $region39: #{tpu_custom_call.1} parent=1 // pred_check_branch
      %1367 = sbr.rel (0) target = $region41
    $region40: #{tpu_custom_call.1} parent=1 // pred_region
      %s1369 = ssub.s32 64, 64
      %1370 = vsyncadd [#allocation4], %s1369
      %s1372 = sshll.u32 [#allocation3], 4
      %s1373 = int_to_ptr.vmem [resolvable:$true] %s1372
      %1375 = dma.vmem_to_hbm [thread:$0]  %s1373, 64, %s9, [#allocation4]
    $region41: #{tpu_custom_call.1} parent=1 // pred_fallthru
      _
    // Predicated region
    $region42: #{tpu_custom_call.1} parent=1 // pred_check
      _
    $region43: #{tpu_custom_call.1} parent=1 // pred_check_branch
      %1377 = sbr.rel (0) target = $region45
    $region44: #{tpu_custom_call.1} parent=1 // pred_region
      %1378 = dma.done [#allocation4], 64
    $region45: #{tpu_custom_call.1} parent=1 // pred_fallthru
      _
    %1379 = vsyncpa [#allocation4], 1

</llo_original>
